<compile_context>
chip_gen: v7x
topology: tpu7x:2x2x1
jax: 0.10.0
libtpu: 0.0.40
codegen_flags: <defaults>
</compile_context>

<pallas_src>
import functools

import jax
import jax.numpy as jnp
from jax.experimental import pallas as pl
from jax.experimental.pallas import tpu as pltpu

BN_EPS = 1e-5
MAX_TILE_N = 2048              # row-tile cap (amortizes ~0.35 us per grid step)
VMEM_TILE_BUDGET = 24 << 20    # bytes allowed for (double-buffered) tiles/weights
VMEM_LIMIT_BYTES = 32 << 20    # explicit scoped-VMEM limit (portable v5e/v6e/v7x)


def _mlp_kernel(x_ref, w1_ref, b1_ref, w2_ref, b2_ref, w3_ref, b3_ref, out_ref):
    """Fused 3-layer MLP: ReLU(x@W1+b1) -> ReLU(.@W2'+b2') -> .@W3'+b3'.

    x / W* arrive as bfloat16 (native MXU rate); accumulation, bias adds and
    ReLUs stay in float32.
    """
    h = jnp.dot(x_ref[...], w1_ref[...],
                preferred_element_type=jnp.float32) + b1_ref[...]
    h = jnp.maximum(h, 0.0)

    h = jnp.dot(h.astype(jnp.bfloat16), w2_ref[...],
                preferred_element_type=jnp.float32) + b2_ref[...]
    h = jnp.maximum(h, 0.0)

    logits = jnp.dot(h.astype(jnp.bfloat16), w3_ref[...],
                     preferred_element_type=jnp.float32) + b3_ref[...]
    out_ref[...] = logits.astype(out_ref.dtype)


def _cdiv(a, b):
    return (a + b - 1) // b


def _round_up(v, m):
    return _cdiv(v, m) * m


def _fold_bn_into_next_linear(gamma, beta, rm, rv, w_next, b_next):
    """y = BN(h) @ W + b  ==  h @ (s[:,None]*W) + (t @ W + b),
    with s = gamma * rsqrt(rv + eps), t = beta - rm * s."""
    s = gamma * jax.lax.rsqrt(rv + BN_EPS)          # (1, hidden)
    t = beta - rm * s                               # (1, hidden)
    w_f = s.reshape(-1, 1) * w_next                 # (hidden, out)
    b_f = t @ w_next + b_next                       # (1, out)
    return w_f, b_f


def _choose_tiling(n, input_dim, hidden, num_classes):
    """Pick (tile_n, n_pad): big tiles, minimal batch padding, >=2 grid steps
    when there is enough work (v7x has 2 TensorCores), VMEM-budget aware."""
    n_min = _round_up(max(n, 8), 8)

    # Bytes that scale with tile_n: double-buffered bf16 x tile, double-buffered
    # f32 output tile, plus f32 hidden activations live in VMEM/vregs.
    per_row = 2 * 2 * input_dim + 2 * 4 * num_classes + 2 * 4 * hidden
    # Fixed: double-buffered bf16 weights + f32 biases.
    fixed = (2 * 2 * (input_dim * hidden + hidden * hidden + hidden * num_classes)
             + 2 * 4 * (2 * hidden + num_classes))
    avail = max(VMEM_TILE_BUDGET - fixed, 8 * per_row)
    max_tile = max(8, min(MAX_TILE_N, (avail // per_row) // 8 * 8))

    num_tiles = _cdiv(n_min, max_tile)
    if n_min >= 16:
        # Give the "parallel" grid axis at least 2 steps so both v7x
        # TensorCores get work; negligible cost on v5e/v6e.
        num_tiles = max(num_tiles, 2)
    tile_n = _round_up(_cdiv(n_min, num_tiles), 8)
    n_pad = tile_n * num_tiles
    return tile_n, n_pad


@jax.jit
def classifier_forward(x, params):
    """Fused Classifier forward pass (eval mode) as a single Pallas kernel.

    x: [N, input_dim] float32
    params: dict of parameter arrays (see init_params).
    Returns [N, num_classes] float32 logits.
    """
    n, input_dim = x.shape
    hidden = params["w1"].shape[1]
    num_classes = params["w3"].shape[1]

    # ---- Fold eval-mode BatchNorms into the following Linear layers ----
    w2f, b2f = _fold_bn_into_next_linear(
        params["g1"], params["beta1"], params["rm1"], params["rv1"],
        params["w2"], params["b2"])
    w3f, b3f = _fold_bn_into_next_linear(
        params["g2"], params["beta2"], params["rm2"], params["rv2"],
        params["w3"], params["b3"])

    # ---- bf16 operands for the MXU (accumulate in f32 inside the kernel) ----
    w1b = params["w1"].astype(jnp.bfloat16)
    w2b = w2f.astype(jnp.bfloat16)
    w3b = w3f.astype(jnp.bfloat16)

    # ---- Batch tiling (padding-aware, >=2 steps when enough rows) ----
    tile_n, n_pad = _choose_tiling(n, input_dim, hidden, num_classes)
    x_b = x.astype(jnp.bfloat16)
    x_p = jnp.pad(x_b, ((0, n_pad - n), (0, 0))) if n_pad != n else x_b
    grid = (n_pad // tile_n,)

    out = pl.pallas_call(
        _mlp_kernel,
        out_shape=jax.ShapeDtypeStruct((n_pad, num_classes), jnp.float32),
        grid=grid,
        in_specs=[
            pl.BlockSpec((tile_n, input_dim),    lambda i: (i, 0)),  # x tile (bf16)
            pl.BlockSpec((input_dim, hidden),    lambda i: (0, 0)),  # W1  (resident)
            pl.BlockSpec((1, hidden),            lambda i: (0, 0)),  # b1
            pl.BlockSpec((hidden, hidden),       lambda i: (0, 0)),  # W2' (BN1 folded)
            pl.BlockSpec((1, hidden),            lambda i: (0, 0)),  # b2'
            pl.BlockSpec((hidden, num_classes),  lambda i: (0, 0)),  # W3' (BN2 folded)
            pl.BlockSpec((1, num_classes),       lambda i: (0, 0)),  # b3'
        ],
        out_specs=pl.BlockSpec((tile_n, num_classes), lambda i: (i, 0)),
        compiler_params=pltpu.CompilerParams(
            dimension_semantics=("parallel",),
            vmem_limit_bytes=VMEM_LIMIT_BYTES),
    )(x_p, w1b, params["b1"], w2b, b2f, w3b, b3f)

    # Padded rows carry garbage (bias/ReLU on zero rows); slice them away here.
    return out[:n] if n_pad != n else out


def init_params(key, input_dim, hidden_dim=128, num_classes=2):
    """Mirror PyTorch default Linear init (uniform(-1/sqrt(fan_in), +)) and a
    freshly-constructed BatchNorm1d (gamma=1, beta=0, rm=0, rv=1).
    Linear weights stored as [in_features, out_features]."""
    ks = jax.random.split(key, 6)

    def linear(kw, kb, fan_in, fan_out):
        bound = 1.0 / jnp.sqrt(jnp.float32(fan_in))
        w = jax.random.uniform(kw, (fan_in, fan_out), jnp.float32, -bound, bound)
        b = jax.random.uniform(kb, (1, fan_out), jnp.float32, -bound, bound)
        return w, b

    w1, b1 = linear(ks[0], ks[1], input_dim, hidden_dim)
    w2, b2 = linear(ks[2], ks[3], hidden_dim, hidden_dim)
    w3, b3 = linear(ks[4], ks[5], hidden_dim, num_classes)

    ones_h = jnp.ones((1, hidden_dim), jnp.float32)
    zeros_h = jnp.zeros((1, hidden_dim), jnp.float32)

    return {
        "w1": w1, "b1": b1, "g1": ones_h, "beta1": zeros_h,
        "rm1": zeros_h, "rv1": ones_h,
        "w2": w2, "b2": b2, "g2": ones_h, "beta2": zeros_h,
        "rm2": zeros_h, "rv2": ones_h,
        "w3": w3, "b3": b3,
    }


def reference_forward(x, params):
    """Pure-JAX f32 reference (un-folded, eval-mode BN) for correctness checks."""
    h = jnp.maximum(x @ params["w1"] + params["b1"], 0.0)
    h = (h - params["rm1"]) / jnp.sqrt(params["rv1"] + BN_EPS) * params["g1"] + params["beta1"]
    h = jnp.maximum(h @ params["w2"] + params["b2"], 0.0)
    h = (h - params["rm2"]) / jnp.sqrt(params["rv2"] + BN_EPS) * params["g2"] + params["beta2"]
    return h @ params["w3"] + params["b3"]


if __name__ == "__main__":
    key = jax.random.PRNGKey(0)
    k_param, k_x = jax.random.split(key)

    batch = 8
    input_dim = 32
    hidden_dim = 128

    params = init_params(k_param, input_dim, hidden_dim)
    x = jax.random.normal(k_x, (batch, input_dim), jnp.float32)

    out = classifier_forward(x, params)
    out = jax.block_until_ready(out)

    ref = reference_forward(x, params)
    assert out.shape == (batch, 2), out.shape
    # bf16 MXU inputs -> loosened tolerance vs. the f32 reference.
    assert jnp.allclose(out, ref, atol=5e-2, rtol=5e-2), \
        float(jnp.max(jnp.abs(out - ref)))

    print("KERNEL_OK")
</pallas_src>

<mosaic_0001>
module attributes {stable_mosaic.version = 11 : i64} {
  func.func @_mlp_kernel(%arg0: i32, %arg1: memref<8x32xbf16, #tpu.memory_space<vmem>>, %arg2: memref<32x128xbf16, #tpu.memory_space<vmem>>, %arg3: memref<1x128xf32, #tpu.memory_space<vmem>>, %arg4: memref<128x128xbf16, #tpu.memory_space<vmem>>, %arg5: memref<1x128xf32, #tpu.memory_space<vmem>>, %arg6: memref<128x2xbf16, #tpu.memory_space<vmem>>, %arg7: memref<1x2xf32, #tpu.memory_space<vmem>>, %arg8: memref<8x2xf32, #tpu.memory_space<vmem>>) attributes {dimension_semantics = [#tpu.dimension_semantics<parallel>], iteration_bounds = array<i64: 1>, scalar_prefetch = 0 : i64, scratch_operands = 0 : i64, tpu.core_type = #tpu.core_type<tc>, window_params = [{transform_indices = @transform_0, window_bounds = array<i64: 8, 32>}, {pipeline_mode = #tpu.pipeline_mode<synchronous>, transform_indices = @transform_1, window_bounds = array<i64: 32, 128>}, {pipeline_mode = #tpu.pipeline_mode<synchronous>, transform_indices = @transform_2, window_bounds = array<i64: 1, 128>}, {pipeline_mode = #tpu.pipeline_mode<synchronous>, transform_indices = @transform_3, window_bounds = array<i64: 128, 128>}, {pipeline_mode = #tpu.pipeline_mode<synchronous>, transform_indices = @transform_4, window_bounds = array<i64: 1, 128>}, {pipeline_mode = #tpu.pipeline_mode<synchronous>, transform_indices = @transform_5, window_bounds = array<i64: 128, 2>}, {pipeline_mode = #tpu.pipeline_mode<synchronous>, transform_indices = @transform_6, window_bounds = array<i64: 1, 2>}, {transform_indices = @transform_7, window_bounds = array<i64: 8, 2>}]} {
    %c0 = arith.constant 0 : index
    %c0_0 = arith.constant 0 : index
    %0 = vector.load %arg1[%c0, %c0_0] : memref<8x32xbf16, #tpu.memory_space<vmem>>, vector<8x32xbf16>
    %c0_1 = arith.constant 0 : index
    %c0_2 = arith.constant 0 : index
    %1 = vector.load %arg2[%c0_1, %c0_2] : memref<32x128xbf16, #tpu.memory_space<vmem>>, vector<32x128xbf16>
    %cst = arith.constant dense<0.000000e+00> : vector<8x128xf32>
    %2 = tpu.matmul %0, %1, %cst {dimension_numbers = #tpu.dot_dimension_numbers<[1], [0], [0], [1], [0, 0, 1, 1], [], []>} : vector<8x32xbf16>, vector<32x128xbf16>, vector<8x128xf32> -> vector<8x128xf32>
    %c0_3 = arith.constant 0 : index
    %c0_4 = arith.constant 0 : index
    %3 = vector.load %arg3[%c0_3, %c0_4] : memref<1x128xf32, #tpu.memory_space<vmem>>, vector<1x128xf32>
    %4 = vector.broadcast %3 : vector<1x128xf32> to vector<8x128xf32>
    %5 = arith.addf %2, %4 : vector<8x128xf32>
    %cst_5 = arith.constant 0.000000e+00 : f32
    %6 = vector.broadcast %cst_5 : f32 to vector<8x128xf32>
    %7 = arith.maximumf %5, %6 : vector<8x128xf32>
    %8 = arith.truncf %7 : vector<8x128xf32> to vector<8x128xbf16>
    %c0_6 = arith.constant 0 : index
    %c0_7 = arith.constant 0 : index
    %9 = vector.load %arg4[%c0_6, %c0_7] : memref<128x128xbf16, #tpu.memory_space<vmem>>, vector<128x128xbf16>
    %cst_8 = arith.constant dense<0.000000e+00> : vector<8x128xf32>
    %10 = tpu.matmul %8, %9, %cst_8 {dimension_numbers = #tpu.dot_dimension_numbers<[1], [0], [0], [1], [0, 0, 1, 1], [], []>} : vector<8x128xbf16>, vector<128x128xbf16>, vector<8x128xf32> -> vector<8x128xf32>
    %c0_9 = arith.constant 0 : index
    %c0_10 = arith.constant 0 : index
    %11 = vector.load %arg5[%c0_9, %c0_10] : memref<1x128xf32, #tpu.memory_space<vmem>>, vector<1x128xf32>
    %12 = vector.broadcast %11 : vector<1x128xf32> to vector<8x128xf32>
    %13 = arith.addf %10, %12 : vector<8x128xf32>
    %cst_11 = arith.constant 0.000000e+00 : f32
    %14 = vector.broadcast %cst_11 : f32 to vector<8x128xf32>
    %15 = arith.maximumf %13, %14 : vector<8x128xf32>
    %16 = arith.truncf %15 : vector<8x128xf32> to vector<8x128xbf16>
    %c0_12 = arith.constant 0 : index
    %c0_13 = arith.constant 0 : index
    %17 = vector.load %arg6[%c0_12, %c0_13] : memref<128x2xbf16, #tpu.memory_space<vmem>>, vector<128x2xbf16>
    %cst_14 = arith.constant dense<0.000000e+00> : vector<8x2xf32>
    %18 = tpu.matmul %16, %17, %cst_14 {dimension_numbers = #tpu.dot_dimension_numbers<[1], [0], [0], [1], [0, 0, 1, 1], [], []>} : vector<8x128xbf16>, vector<128x2xbf16>, vector<8x2xf32> -> vector<8x2xf32>
    %c0_15 = arith.constant 0 : index
    %c0_16 = arith.constant 0 : index
    %19 = vector.load %arg7[%c0_15, %c0_16] : memref<1x2xf32, #tpu.memory_space<vmem>>, vector<1x2xf32>
    %20 = vector.broadcast %19 : vector<1x2xf32> to vector<8x2xf32>
    %21 = arith.addf %18, %20 : vector<8x2xf32>
    %c0_17 = arith.constant 0 : index
    %c0_18 = arith.constant 0 : index
    %22 = vector.load %arg8[%c0_17, %c0_18] : memref<8x2xf32, #tpu.memory_space<vmem>>, vector<8x2xf32>
    tpu.vector_store %arg8[%c0_17, %c0_18], %21 {strides = array<i32>} : memref<8x2xf32, #tpu.memory_space<vmem>>, vector<8x2xf32>,
    return
  }
  func.func @transform_0(%arg0: i32) -> (i32, i32) {
    %c0_i32 = arith.constant 0 : i32
    %c0_i32_0 = arith.constant 0 : i32
    return %arg0, %c0_i32 : i32, i32
  }
  func.func @transform_1(%arg0: i32) -> (i32, i32) {
    %c0_i32 = arith.constant 0 : i32
    %c0_i32_0 = arith.constant 0 : i32
    %c0_i32_1 = arith.constant 0 : i32
    return %c0_i32, %c0_i32_0 : i32, i32
  }
  func.func @transform_2(%arg0: i32) -> (i32, i32) {
    %c0_i32 = arith.constant 0 : i32
    %c0_i32_0 = arith.constant 0 : i32
    %c0_i32_1 = arith.constant 0 : i32
    return %c0_i32, %c0_i32_0 : i32, i32
  }
  func.func @transform_3(%arg0: i32) -> (i32, i32) {
    %c0_i32 = arith.constant 0 : i32
    %c0_i32_0 = arith.constant 0 : i32
    %c0_i32_1 = arith.constant 0 : i32
    return %c0_i32, %c0_i32_0 : i32, i32
  }
  func.func @transform_4(%arg0: i32) -> (i32, i32) {
    %c0_i32 = arith.constant 0 : i32
    %c0_i32_0 = arith.constant 0 : i32
    %c0_i32_1 = arith.constant 0 : i32
    return %c0_i32, %c0_i32_0 : i32, i32
  }
  func.func @transform_5(%arg0: i32) -> (i32, i32) {
    %c0_i32 = arith.constant 0 : i32
    %c0_i32_0 = arith.constant 0 : i32
    %c0_i32_1 = arith.constant 0 : i32
    return %c0_i32, %c0_i32_0 : i32, i32
  }
  func.func @transform_6(%arg0: i32) -> (i32, i32) {
    %c0_i32 = arith.constant 0 : i32
    %c0_i32_0 = arith.constant 0 : i32
    %c0_i32_1 = arith.constant 0 : i32
    return %c0_i32, %c0_i32_0 : i32, i32
  }
  func.func @transform_7(%arg0: i32) -> (i32, i32) {
    %c0_i32 = arith.constant 0 : i32
    %c0_i32_0 = arith.constant 0 : i32
    return %arg0, %c0_i32 : i32, i32
  }
}

</mosaic_0001>

<llo_original>
// kernel: classifier_forward.1
$region0: #{classifier_forward.1}
  #allocation0 [shape = 'u32[]', space=smem, size = 0x4, offset = 0x4, fixed_abs, tag = 'smem constant byte address 0x4 - core index']
  #allocation1 [shape = 'u32[144,128]{1,0:T(1,128)}', space=vmem, size = 0x12000, scoped, tag = 'internal scratch']
  %s0 = inlined_call_operand.vmem [shape: bf16[8,32], index: 0, kind: input, shape index: {}]
  %s1 = inlined_call_operand.vmem [shape: bf16[32,128], index: 1, kind: input, shape index: {}]
  %s2 = inlined_call_operand.vmem [shape: f32[1,128], index: 2, kind: input, shape index: {}]
  %s3 = inlined_call_operand.vmem [shape: bf16[128,128], index: 3, kind: input, shape index: {}]
  %s4 = inlined_call_operand.vmem [shape: f32[1,128], index: 4, kind: input, shape index: {}]
  %s5 = inlined_call_operand.vmem [shape: bf16[128,2], index: 5, kind: input, shape index: {}]
  %s6 = inlined_call_operand.vmem [shape: f32[1,2], index: 6, kind: input, shape index: {}]
  %s7 = inlined_call_operand.vmem [shape: f32[8,2], index: 7, kind: output, shape index: {}]
  %s8 = sld [smem:[#allocation0]]
  $region38: #{classifier_forward.1} parent=0
    _
  %s10 = ssub.s32 1, %s8
  %s11 = scalar_select 0, %s10, %s8
  // Predicated region
  $region2: #{classifier_forward.1} parent=0 // pred_check
    _
  $region3: #{classifier_forward.1} parent=0 // pred_check_branch
    %13 = sbr.rel (0) target = $region5
  $region4: #{classifier_forward.1} parent=0 // pred_region
    _
  $region5: #{classifier_forward.1} parent=0 // pred_fallthru
    _
  // Predicated region
  $region6: #{classifier_forward.1} parent=0 // pred_check
    _
  $region7: #{classifier_forward.1} parent=0 // pred_check_branch
    %15 = sbr.rel (0) target = $region9
  $region8: #{classifier_forward.1} parent=0 // pred_region
    _
  $region9: #{classifier_forward.1} parent=0 // pred_fallthru
    _
  // Predicated region
  $region10: #{classifier_forward.1} parent=0 // pred_check
    _
  $region11: #{classifier_forward.1} parent=0 // pred_check_branch
    %17 = sbr.rel (0) target = $region13
  $region12: #{classifier_forward.1} parent=0 // pred_region
    _
  $region13: #{classifier_forward.1} parent=0 // pred_fallthru
    _
  // Predicated region
  $region14: #{classifier_forward.1} parent=0 // pred_check
    _
  $region15: #{classifier_forward.1} parent=0 // pred_check_branch
    %19 = sbr.rel (0) target = $region17
  $region16: #{classifier_forward.1} parent=0 // pred_region
    _
  $region17: #{classifier_forward.1} parent=0 // pred_fallthru
    _
  // Predicated region
  $region18: #{classifier_forward.1} parent=0 // pred_check
    _
  $region19: #{classifier_forward.1} parent=0 // pred_check_branch
    %21 = sbr.rel (0) target = $region21
  $region20: #{classifier_forward.1} parent=0 // pred_region
    _
  $region21: #{classifier_forward.1} parent=0 // pred_fallthru
    _
  // Predicated region
  $region22: #{classifier_forward.1} parent=0 // pred_check
    _
  $region23: #{classifier_forward.1} parent=0 // pred_check_branch
    %23 = sbr.rel (0) target = $region25
  $region24: #{classifier_forward.1} parent=0 // pred_region
    _
  $region25: #{classifier_forward.1} parent=0 // pred_fallthru
    _
  // Predicated region
  $region26: #{classifier_forward.1} parent=0 // pred_check
    _
  $region27: #{classifier_forward.1} parent=0 // pred_check_branch
    %25 = sbr.rel (0) target = $region29
  $region28: #{classifier_forward.1} parent=0 // pred_region
    _
  $region29: #{classifier_forward.1} parent=0 // pred_fallthru
    _
  %v27 = vld [vmem:[%s0] sm:$0xf]
  %v28 = vld [vmem:[%s1] sm:$0xf]
  %v29 = vld [vmem:[%s1 + $0x4] sm:$0xf]
  %v30 = vld [vmem:[%s1 + $0x8] sm:$0xf]
  %v31 = vld [vmem:[%s1 + $0xc] sm:$0xf]
  %v32 = vld [vmem:[%s2] sm:$0x1]
  %v34 = vlaneseq
  %v35 = vshrl.u32 %v34, 7
  %v36 = vsub.s32 0, %v35
  %v37 = vrot.slane %v32, %v36
  %v43 = vunpack.c.l.b16 %v28
  %v44 = vunpack.c.l.b16 %v29
  %v45 = vunpack.c.l.b16 %v30
  %v46 = vunpack.c.l.b16 %v31
  %v47 = vpack.c.b16 %v44, %v43
  %v48 = vpack.c.b16 %v46, %v45
  %vm51 = vcmask 261120
  %v53 = vsel %vm51, %v27, 0
  %55 = vmatprep.subr.bf16.mxu0 0
  %56 = vmatpush1.bf16.msra.mxu0 %v47
  %57 = vmatprep.subr.bf16.mxu0 0
  %58 = vmatpush1.bf16.msra.mxu0 %v48
  %59 = vmatprep.subr.bf16.mxu0 0
  %60 = vmatpush1.bf16.msra.mxu0 0
  %61 = vmatprep.subr.bf16.mxu0 0
  %62 = vmatpush1.bf16.msra.mxu0 0
  %63 = vmatprep.subr.bf16.mxu0 0
  %64 = vmatpush1.bf16.msra.mxu0 0
  %65 = vmatprep.subr.bf16.mxu0 0
  %66 = vmatpush1.bf16.msra.mxu0 0
  %67 = vmatprep.subr.bf16.mxu0 0
  %68 = vmatpush1.bf16.msra.mxu0 0
  %69 = vmatprep.subr.bf16.mxu0 0
  %70 = vmatpush1.bf16.msra.mxu0 0
  %71 = vmatprep.subr.bf16.mxu0 0
  %72 = vmatpush1.bf16.msra.mxu0 0
  %73 = vmatprep.subr.bf16.mxu0 0
  %74 = vmatpush1.bf16.msra.mxu0 0
  %75 = vmatprep.subr.bf16.mxu0 0
  %76 = vmatpush1.bf16.msra.mxu0 0
  %77 = vmatprep.subr.bf16.mxu0 0
  %78 = vmatpush1.bf16.msra.mxu0 0
  %79 = vmatprep.subr.bf16.mxu0 0
  %80 = vmatpush1.bf16.msra.mxu0 0
  %81 = vmatprep.subr.bf16.mxu0 0
  %82 = vmatpush1.bf16.msra.mxu0 0
  %83 = vmatprep.subr.bf16.mxu0 0
  %84 = vmatpush1.bf16.msra.mxu0 0
  %85 = vmatprep.subr.bf16.mxu0 0
  %86 = vmatpush1.bf16.msra.mxu0 0
  %87 = vmatprep.mubr.bf16.mxu0 0
  %88 = vmatmul.mubr.bf16.gmra.mrb[0].mxu0 %v53
  %v89 = vpop.f32.mrb[0].mxu0
  %v90 = vadd.f32 %v37, %v89
  %v91 = vpop.f32.mrb[0].mxu0
  %v92 = vpop.f32.mrb[0].mxu0
  %v93 = vpop.f32.mrb[0].mxu0
  %94 = vdwg.mxu0
  %v95 = vmax.f32 %v90, 0.0
  %v96 = vpack.c.bf16 %v95, %v95
  %v97 = vld [vmem:[%s3] sm:$0xf]
  %v98 = vld [vmem:[%s3 + $0x4] sm:$0xf]
  %v99 = vld [vmem:[%s3 + $0x8] sm:$0xf]
  %v100 = vld [vmem:[%s3 + $0xc] sm:$0xf]
  %v101 = vld [vmem:[%s3 + $0x10] sm:$0xf]
  %v102 = vld [vmem:[%s3 + $0x14] sm:$0xf]
  %v103 = vld [vmem:[%s3 + $0x18] sm:$0xf]
  %v104 = vld [vmem:[%s3 + $0x1c] sm:$0xf]
  %v105 = vld [vmem:[%s3 + $0x20] sm:$0xf]
  %v106 = vld [vmem:[%s3 + $0x24] sm:$0xf]
  %v107 = vld [vmem:[%s3 + $0x28] sm:$0xf]
  %v108 = vld [vmem:[%s3 + $0x2c] sm:$0xf]
  %v109 = vld [vmem:[%s3 + $0x30] sm:$0xf]
  %v110 = vld [vmem:[%s3 + $0x34] sm:$0xf]
  %v111 = vld [vmem:[%s3 + $0x38] sm:$0xf]
  %v112 = vld [vmem:[%s3 + $0x3c] sm:$0xf]
  %v113 = vld [vmem:[%s4] sm:$0x1]
  %v115 = vlaneseq
  %v116 = vshrl.u32 %v115, 7
  %v117 = vsub.s32 0, %v116
  %v118 = vrot.slane %v113, %v117
  %v136 = vunpack.c.l.b16 %v97
  %v137 = vunpack.c.l.b16 %v98
  %v138 = vunpack.c.l.b16 %v99
  %v139 = vunpack.c.l.b16 %v100
  %v140 = vunpack.c.l.b16 %v101
  %v141 = vunpack.c.l.b16 %v102
  %v142 = vunpack.c.l.b16 %v103
  %v143 = vunpack.c.l.b16 %v104
  %v144 = vunpack.c.l.b16 %v105
  %v145 = vunpack.c.l.b16 %v106
  %v146 = vunpack.c.l.b16 %v107
  %v147 = vunpack.c.l.b16 %v108
  %v148 = vunpack.c.l.b16 %v109
  %v149 = vunpack.c.l.b16 %v110
  %v150 = vunpack.c.l.b16 %v111
  %v151 = vunpack.c.l.b16 %v112
  %v152 = vpack.c.b16 %v137, %v136
  %v153 = vpack.c.b16 %v139, %v138
  %v154 = vpack.c.b16 %v141, %v140
  %v155 = vpack.c.b16 %v143, %v142
  %v156 = vpack.c.b16 %v145, %v144
  %v157 = vpack.c.b16 %v147, %v146
  %v158 = vpack.c.b16 %v149, %v148
  %v159 = vpack.c.b16 %v151, %v150
  %168 = vmatprep.subr.bf16.mxu0 0
  %169 = vmatpush1.bf16.msra.mxu0 %v152
  %170 = vmatprep.subr.bf16.mxu0 0
  %171 = vmatpush1.bf16.msra.mxu0 %v153
  %172 = vmatprep.subr.bf16.mxu0 0
  %173 = vmatpush1.bf16.msra.mxu0 %v154
  %174 = vmatprep.subr.bf16.mxu0 0
  %175 = vmatpush1.bf16.msra.mxu0 %v155
  %176 = vmatprep.subr.bf16.mxu0 0
  %177 = vmatpush1.bf16.msra.mxu0 %v156
  %178 = vmatprep.subr.bf16.mxu0 0
  %179 = vmatpush1.bf16.msra.mxu0 %v157
  %180 = vmatprep.subr.bf16.mxu0 0
  %181 = vmatpush1.bf16.msra.mxu0 %v158
  %182 = vmatprep.subr.bf16.mxu0 0
  %183 = vmatpush1.bf16.msra.mxu0 %v159
  %184 = vmatprep.subr.bf16.mxu0 0
  %185 = vmatpush1.bf16.msra.mxu0 0
  %186 = vmatprep.subr.bf16.mxu0 0
  %187 = vmatpush1.bf16.msra.mxu0 0
  %188 = vmatprep.subr.bf16.mxu0 0
  %189 = vmatpush1.bf16.msra.mxu0 0
  %190 = vmatprep.subr.bf16.mxu0 0
  %191 = vmatpush1.bf16.msra.mxu0 0
  %192 = vmatprep.subr.bf16.mxu0 0
  %193 = vmatpush1.bf16.msra.mxu0 0
  %194 = vmatprep.subr.bf16.mxu0 0
  %195 = vmatpush1.bf16.msra.mxu0 0
  %196 = vmatprep.subr.bf16.mxu0 0
  %197 = vmatpush1.bf16.msra.mxu0 0
  %198 = vmatprep.subr.bf16.mxu0 0
  %199 = vmatpush1.bf16.msra.mxu0 0
  %200 = vmatprep.mubr.bf16.mxu0 0
  %201 = vmatmul.mubr.bf16.gmra.mrb[0].mxu0 %v96
  %v202 = vpop.f32.mrb[0].mxu0
  %v203 = vadd.f32 %v118, %v202
  %v204 = vpop.f32.mrb[0].mxu0
  %v205 = vpop.f32.mrb[0].mxu0
  %v206 = vpop.f32.mrb[0].mxu0
  %207 = vdwg.mxu0
  %v208 = vmax.f32 %v203, 0.0
  %v209 = vpack.c.bf16 %v208, %v208
  %v210 = vld [vmem:[%s5] sm:$0xf]
  %v211 = vld [vmem:[%s5 + $0x4] sm:$0xf]
  %v212 = vld [vmem:[%s5 + $0x8] sm:$0xf]
  %v213 = vld [vmem:[%s5 + $0xc] sm:$0xf]
  %v214 = vld [vmem:[%s5 + $0x10] sm:$0xf]
  %v215 = vld [vmem:[%s5 + $0x14] sm:$0xf]
  %v216 = vld [vmem:[%s5 + $0x18] sm:$0xf]
  %v217 = vld [vmem:[%s5 + $0x1c] sm:$0xf]
  %v218 = vld [vmem:[%s5 + $0x20] sm:$0xf]
  %v219 = vld [vmem:[%s5 + $0x24] sm:$0xf]
  %v220 = vld [vmem:[%s5 + $0x28] sm:$0xf]
  %v221 = vld [vmem:[%s5 + $0x2c] sm:$0xf]
  %v222 = vld [vmem:[%s5 + $0x30] sm:$0xf]
  %v223 = vld [vmem:[%s5 + $0x34] sm:$0xf]
  %v224 = vld [vmem:[%s5 + $0x38] sm:$0xf]
  %v225 = vld [vmem:[%s5 + $0x3c] sm:$0xf]
  %v226 = vld [vmem:[%s6] sm:$0x1]
  %v228 = vlaneseq
  %v229 = vshrl.u32 %v228, 7
  %v230 = vsub.s32 0, %v229
  %v231 = vrot.slane %v226, %v230
  %v249 = vunpack.c.l.b16 %v210
  %v250 = vunpack.c.l.b16 %v211
  %v251 = vunpack.c.l.b16 %v212
  %v252 = vunpack.c.l.b16 %v213
  %v253 = vunpack.c.l.b16 %v214
  %v254 = vunpack.c.l.b16 %v215
  %v255 = vunpack.c.l.b16 %v216
  %v256 = vunpack.c.l.b16 %v217
  %v257 = vunpack.c.l.b16 %v218
  %v258 = vunpack.c.l.b16 %v219
  %v259 = vunpack.c.l.b16 %v220
  %v260 = vunpack.c.l.b16 %v221
  %v261 = vunpack.c.l.b16 %v222
  %v262 = vunpack.c.l.b16 %v223
  %v263 = vunpack.c.l.b16 %v224
  %v264 = vunpack.c.l.b16 %v225
  %v265 = vpack.c.b16 %v250, %v249
  %v266 = vpack.c.b16 %v252, %v251
  %v267 = vpack.c.b16 %v254, %v253
  %v268 = vpack.c.b16 %v256, %v255
  %v269 = vpack.c.b16 %v258, %v257
  %v270 = vpack.c.b16 %v260, %v259
  %v271 = vpack.c.b16 %v262, %v261
  %v272 = vpack.c.b16 %v264, %v263
  %281 = vmatprep.subr.bf16.mxu0 0
  %282 = vmatpush1.bf16.msra.mxu0 %v265
  %283 = vmatprep.subr.bf16.mxu0 0
  %284 = vmatpush1.bf16.msra.mxu0 %v266
  %285 = vmatprep.subr.bf16.mxu0 0
  %286 = vmatpush1.bf16.msra.mxu0 %v267
  %287 = vmatprep.subr.bf16.mxu0 0
  %288 = vmatpush1.bf16.msra.mxu0 %v268
  %289 = vmatprep.subr.bf16.mxu0 0
  %290 = vmatpush1.bf16.msra.mxu0 %v269
  %291 = vmatprep.subr.bf16.mxu0 0
  %292 = vmatpush1.bf16.msra.mxu0 %v270
  %293 = vmatprep.subr.bf16.mxu0 0
  %294 = vmatpush1.bf16.msra.mxu0 %v271
  %295 = vmatprep.subr.bf16.mxu0 0
  %296 = vmatpush1.bf16.msra.mxu0 %v272
  %297 = vmatprep.subr.bf16.mxu0 0
  %298 = vmatpush1.bf16.msra.mxu0 0
  %299 = vmatprep.subr.bf16.mxu0 0
  %300 = vmatpush1.bf16.msra.mxu0 0
  %301 = vmatprep.subr.bf16.mxu0 0
  %302 = vmatpush1.bf16.msra.mxu0 0
  %303 = vmatprep.subr.bf16.mxu0 0
  %304 = vmatpush1.bf16.msra.mxu0 0
  %305 = vmatprep.subr.bf16.mxu0 0
  %306 = vmatpush1.bf16.msra.mxu0 0
  %307 = vmatprep.subr.bf16.mxu0 0
  %308 = vmatpush1.bf16.msra.mxu0 0
  %309 = vmatprep.subr.bf16.mxu0 0
  %310 = vmatpush1.bf16.msra.mxu0 0
  %311 = vmatprep.subr.bf16.mxu0 0
  %312 = vmatpush1.bf16.msra.mxu0 0
  %313 = vmatprep.mubr.bf16.mxu0 0
  %314 = vmatmul.mubr.bf16.gmra.mrb[0].mxu0 %v209
  %v315 = vpop.f32.mrb[0].mxu0
  %v316 = vadd.f32 %v231, %v315
  %v317 = vpop.f32.mrb[0].mxu0
  %v318 = vpop.f32.mrb[0].mxu0
  %v319 = vpop.f32.mrb[0].mxu0
  %320 = vdwg.mxu0
  %vm321 = vcmask 15360
  %322 = vst.msk [vmem:[%s7] sm:$0xff] %vm321, %v316
  // Predicated region
  $region30: #{classifier_forward.1} parent=0 // pred_check
    _
  $region31: #{classifier_forward.1} parent=0 // pred_check_branch
    %324 = sbr.rel (0) target = $region33
  $region32: #{classifier_forward.1} parent=0 // pred_region
    _
  $region33: #{classifier_forward.1} parent=0 // pred_fallthru
    _
  // Predicated region
  $region34: #{classifier_forward.1} parent=0 // pred_check
    _
  $region35: #{classifier_forward.1} parent=0 // pred_check_branch
    %326 = sbr.rel (0) target = $region37
  $region36: #{classifier_forward.1} parent=0 // pred_region
    _
  $region37: #{classifier_forward.1} parent=0 // pred_fallthru
    _

</llo_original>
